<compile_context>
chip_gen: v7x
topology: tpu7x:2x2x1
jax: 0.10.0
libtpu: 0.0.40
codegen_flags: <defaults>
</compile_context>

<pallas_src>
import jax
import jax.numpy as jnp
from jax.experimental import pallas as pl
from jax.experimental.pallas import tpu as pltpu

_LANE = 128
_MAX_TILE_BYTES = 2 * 1024 * 1024    # 2 MiB/buffer; 6 live double-buffered buffers = 12 MiB
_MIN_SPLIT_ROWS = 512                # never shrink a tile below this just to make more blocks
_MIN_PALLAS_ELEMS = 128 * 1024       # below ~0.5 MiB (f32) the fused-XLA path wins


def _extra_conv_kernel(cls_ref, leaky_ref, relu_ref):
    x = cls_ref[...]
    slope = jnp.asarray(0.01, x.dtype)
    # LeakyReLU(negative_slope=0.01)
    leaky_ref[...] = jnp.where(x >= 0, x, x * slope)
    # ReLU
    relu_ref[...] = jnp.maximum(x, jnp.zeros_like(x))


def _sublane_multiple(dtype) -> int:
    """f32 -> 8, bf16/f16 -> 16, int8/fp8 -> 32 (sub-32-bit packs along sublanes)."""
    itemsize = jnp.dtype(dtype).itemsize
    return max(8, 32 // max(1, itemsize))


def _num_tensorcores() -> int:
    """Best-effort TensorCores-per-chip (v7x=2, v5e/v6e=1). Conservative default: 1."""
    try:
        info = pltpu.get_tpu_info()
    except Exception:
        return 1
    for attr in ("num_cores", "num_tensorcores", "tensor_cores_per_chip", "cores_per_chip"):
        v = getattr(info, attr, None)
        if isinstance(v, int) and v > 0:
            return v
    return 1


def _pick_tile_rows(rows: int, dtype, num_cores: int) -> int:
    """Row tile for the (rows, 128) slab.

    1-TC chips: largest tile under the VMEM byte budget (no artificial split).
    Multi-TC chips: aim for >= 2 blocks per core so each core keeps its own
    double-buffer pipeline full, but never below _MIN_SPLIT_ROWS (tile-size ->
    bandwidth curve flattens above ~512 rows)."""
    itemsize = jnp.dtype(dtype).itemsize
    sublane = _sublane_multiple(dtype)
    max_rows = max(sublane, (_MAX_TILE_BYTES // (_LANE * itemsize)) // sublane * sublane)

    if num_cores <= 1:
        return min(rows, max_rows)

    target_blocks = 2 * num_cores
    tr = -(-rows // target_blocks)            # ceil(rows / target_blocks)
    tr = -(-tr // sublane) * sublane          # round up to dtype sublane multiple
    tr = max(_MIN_SPLIT_ROWS, min(tr, max_rows))
    if tr >= rows:
        return rows
    return tr


def extra_conv_forward(_input):
    """JAX/Pallas equivalent of extra_conv.forward.

    _input: dict with 'cls' (NCHW) and 'wh' (NCHW).
    Returns dict with 'cls' (leaky relu), 'mask_cls' (relu), 'wh' (identity).
    """
    cls_x = _input["cls"]
    wh = _input["wh"]

    orig_shape = cls_x.shape
    total = cls_x.size

    # Fallback: small tensors (launch + pipeline overhead dominates) or totals
    # not a multiple of 128 lanes (padding would double the HBM traffic of a
    # bandwidth-bound op).  XLA's multi-output elementwise fusion is at
    # roofline for these.
    if total < _MIN_PALLAS_ELEMS or total % _LANE != 0:
        slope = jnp.asarray(0.01, cls_x.dtype)
        leaky = jnp.where(cls_x >= 0, cls_x, cls_x * slope)
        relu = jnp.maximum(cls_x, jnp.zeros_like(cls_x))
        return {"cls": leaky, "mask_cls": relu, "wh": wh}

    rows = total // _LANE
    x2d = cls_x.reshape(rows, _LANE)          # zero-copy lane-dense view

    num_cores = _num_tensorcores()
    tr = _pick_tile_rows(rows, cls_x.dtype, num_cores)
    grid = (pl.cdiv(rows, tr),)               # ragged last block masked by Pallas

    leaky2d, relu2d = pl.pallas_call(
        _extra_conv_kernel,
        out_shape=(
            jax.ShapeDtypeStruct((rows, _LANE), cls_x.dtype),
            jax.ShapeDtypeStruct((rows, _LANE), cls_x.dtype),
        ),
        grid_spec=pltpu.PrefetchScalarGridSpec(
            num_scalar_prefetch=0,
            grid=grid,
            in_specs=[pl.BlockSpec((tr, _LANE), lambda i: (i, 0))],
            out_specs=[
                pl.BlockSpec((tr, _LANE), lambda i: (i, 0)),
                pl.BlockSpec((tr, _LANE), lambda i: (i, 0)),
            ],
        ),
        compiler_params=pltpu.CompilerParams(
            dimension_semantics=("parallel",)
        ),
        # TODO(synk): if the caller can donate `cls`, pass
        # input_output_aliases={0: 0} to write the LeakyReLU result in place
        # and save one HBM allocation.
    )(x2d)

    return {
        "cls": leaky2d.reshape(orig_shape),
        "mask_cls": relu2d.reshape(orig_shape),
        "wh": wh,
    }


def _check(out, cls_x, wh_x, atol=1e-6, rtol=1e-5):
    slope = jnp.asarray(0.01, cls_x.dtype)
    ref_leaky = jnp.where(cls_x >= 0, cls_x, cls_x * slope)
    ref_relu = jnp.maximum(cls_x, jnp.zeros_like(cls_x))
    assert jnp.allclose(out["cls"].astype(jnp.float32),
                        ref_leaky.astype(jnp.float32), atol=atol, rtol=rtol)
    assert jnp.allclose(out["mask_cls"].astype(jnp.float32),
                        ref_relu.astype(jnp.float32), atol=atol, rtol=rtol)
    assert jnp.array_equal(out["wh"], wh_x)


if __name__ == "__main__":
    key = jax.random.PRNGKey(0)
    k1, k2, k3, k4 = jax.random.split(key, 4)

    # 1) Small NCHW demo (2,4,16,16): below the Pallas threshold -> fused-XLA
    #    fallback path (kernel-launch overhead would dominate an 8 KiB tensor).
    cls_small = jax.random.normal(k1, (2, 4, 16, 16), dtype=jnp.float32)
    wh_small = jax.random.normal(k2, (2, 4, 16, 16), dtype=jnp.float32)
    out_small = extra_conv_forward({"cls": cls_small, "wh": wh_small})
    jax.block_until_ready(out_small)
    _check(out_small, cls_small, wh_small, atol=1e-6)

    # 2) f32 Pallas path: 2*8*96*96 = 147456 elems -> rows = 1152 (non-power-
    #    of-two, exercises full-block / ragged tiling depending on core count).
    cls_f32 = jax.random.normal(k3, (2, 8, 96, 96), dtype=jnp.float32)
    out_f32 = extra_conv_forward({"cls": cls_f32, "wh": cls_f32})
    jax.block_until_ready(out_f32)
    _check(out_f32, cls_f32, cls_f32, atol=1e-6)

    # 3) bf16 Pallas path: exercises the dtype-aware (16-row) sublane rounding.
    cls_bf16 = jax.random.normal(k4, (2, 16, 64, 64), dtype=jnp.float32).astype(jnp.bfloat16)
    out_bf16 = extra_conv_forward({"cls": cls_bf16, "wh": cls_bf16})
    jax.block_until_ready(out_bf16)
    _check(out_bf16, cls_bf16, cls_bf16, atol=5e-2, rtol=2e-2)

    print("KERNEL_OK")
</pallas_src>

<mosaic_0001>
module attributes {stable_mosaic.version = 11 : i64} {
  func.func @_extra_conv_kernel(%arg0: i32, %arg1: memref<1152x128xf32, #tpu.memory_space<vmem>>, %arg2: memref<1152x128xf32, #tpu.memory_space<vmem>>, %arg3: memref<1152x128xf32, #tpu.memory_space<vmem>>) attributes {dimension_semantics = [#tpu.dimension_semantics<parallel>], iteration_bounds = array<i64: 1>, scalar_prefetch = 0 : i64, scratch_operands = 0 : i64, tpu.core_type = #tpu.core_type<tc>, window_params = [{transform_indices = @transform_0, window_bounds = array<i64: 1152, 128>}, {transform_indices = @transform_1, window_bounds = array<i64: 1152, 128>}, {transform_indices = @transform_2, window_bounds = array<i64: 1152, 128>}]} {
    %c0 = arith.constant 0 : index
    %c0_0 = arith.constant 0 : index
    %0 = vector.load %arg1[%c0, %c0_0] : memref<1152x128xf32, #tpu.memory_space<vmem>>, vector<1152x128xf32>
    %cst = arith.constant 0.000000e+00 : f32
    %1 = vector.broadcast %cst : f32 to vector<1152x128xf32>
    %2 = arith.cmpf oge, %0, %1 : vector<1152x128xf32>
    %cst_1 = arith.constant 0.00999999977 : f32
    %3 = vector.broadcast %cst_1 : f32 to vector<1152x128xf32>
    %4 = arith.mulf %0, %3 : vector<1152x128xf32>
    %5 = arith.select %2, %0, %4 : vector<1152x128xi1>, vector<1152x128xf32>
    %c0_2 = arith.constant 0 : index
    %c0_3 = arith.constant 0 : index
    %6 = vector.load %arg2[%c0_2, %c0_3] : memref<1152x128xf32, #tpu.memory_space<vmem>>, vector<1152x128xf32>
    tpu.vector_store %arg2[%c0_2, %c0_3], %5 {strides = array<i32>} : memref<1152x128xf32, #tpu.memory_space<vmem>>, vector<1152x128xf32>,
    %cst_4 = arith.constant 0.000000e+00 : f32
    %7 = vector.broadcast %cst_4 : f32 to vector<1152x128xf32>
    %8 = arith.maximumf %0, %7 : vector<1152x128xf32>
    %c0_5 = arith.constant 0 : index
    %c0_6 = arith.constant 0 : index
    %9 = vector.load %arg3[%c0_5, %c0_6] : memref<1152x128xf32, #tpu.memory_space<vmem>>, vector<1152x128xf32>
    tpu.vector_store %arg3[%c0_5, %c0_6], %8 {strides = array<i32>} : memref<1152x128xf32, #tpu.memory_space<vmem>>, vector<1152x128xf32>,
    return
  }
  func.func @transform_0(%arg0: i32) -> (i32, i32) {
    %c0_i32 = arith.constant 0 : i32
    %c0_i32_0 = arith.constant 0 : i32
    return %arg0, %c0_i32 : i32, i32
  }
  func.func @transform_1(%arg0: i32) -> (i32, i32) {
    %c0_i32 = arith.constant 0 : i32
    %c0_i32_0 = arith.constant 0 : i32
    return %arg0, %c0_i32 : i32, i32
  }
  func.func @transform_2(%arg0: i32) -> (i32, i32) {
    %c0_i32 = arith.constant 0 : i32
    %c0_i32_0 = arith.constant 0 : i32
    return %arg0, %c0_i32 : i32, i32
  }
}

</mosaic_0001>

<llo_original>
// kernel: tpu_custom_call.1
$region0: #{tpu_custom_call.1}
  #allocation0 [shape = 'u32[]', space=smem, size = 0x4, offset = 0x4, fixed_abs, tag = 'smem constant byte address 0x4 - core index']
  #allocation1 [shape = 'u32[144,128]{1,0:T(1,128)}', space=vmem, size = 0x12000, scoped, tag = 'internal scratch']
  %s0 = inlined_call_operand.hbm [shape: f32[1152,128], index: 0, kind: input, shape index: {}]
  %s1 = inlined_call_operand.hbm [shape: f32[1152,128], index: 1, kind: output, shape index: {0}]
  %s2 = inlined_call_operand.hbm [shape: f32[1152,128], index: 2, kind: output, shape index: {1}]
  %3 = xla_tuple %s1, %s2
  %s4 = sld [smem:[#allocation0]]
  $region26: #{tpu_custom_call.1} parent=0
    _
  %s6 = ssub.s32 1, %s4
  %s7 = scalar_select 0, %s6, %s4
  $region1: #{tpu_custom_call.1} parent=0
    #allocation2 [shape = 'u8[589824]{0}', space=vmem, size = 0x90000, scoped, tag = 'input window, operand 0, single buffered']
    #allocation3 [shape = 's32[1]{0}', space=sflag, size = 0x4, scoped, tag = 'scoped memory for tpu_custom_call.1']
    #allocation4 [shape = 's32[1]{0}', space=sflag, size = 0x4, scoped, tag = 'scoped memory for tpu_custom_call.1']
    #allocation5 [shape = 'u8[589824]{0}', space=vmem, size = 0x90000, scoped, tag = 'output window, operand 0, single buffered']
    #allocation6 [shape = 'u8[589824]{0}', space=vmem, size = 0x90000, scoped, tag = 'output window, operand 1, single buffered']
    #allocation7 [shape = 's32[1]{0}', space=sflag, size = 0x4, scoped, tag = 'scoped memory for tpu_custom_call.1']
    %8 = vsyncpa [#allocation3], 0
    %9 = vsyncpa [#allocation4], 0
    %10 = vsyncpa [#allocation7], 0
    // Predicated region
    $region2: #{tpu_custom_call.1} parent=1 // pred_check
      _
    $region3: #{tpu_custom_call.1} parent=1 // pred_check_branch
      %12 = sbr.rel (0) target = $region5
    $region4: #{tpu_custom_call.1} parent=1 // pred_region
      %s14 = ssub.s32 18432, 18432
      %15 = vsyncadd [#allocation3], %s14
      %s16 = sshll.u32 [#allocation2], 4
      %s17 = int_to_ptr.vmem [resolvable:$true] %s16
      %22 = dma.hbm_to_vmem [thread:$0]  %s0, 18432, %s17, [#allocation3], 128, 128, 8
    $region5: #{tpu_custom_call.1} parent=1 // pred_fallthru
      _
    // Predicated region
    $region6: #{tpu_custom_call.1} parent=1 // pred_check
      _
    $region7: #{tpu_custom_call.1} parent=1 // pred_check_branch
      %24 = sbr.rel (0) target = $region9
    $region8: #{tpu_custom_call.1} parent=1 // pred_region
      %25 = dma.done [#allocation3], 18432
    $region9: #{tpu_custom_call.1} parent=1 // pred_fallthru
      _
    %v26 = vld [vmem:[#allocation2] sm:$0xff]
    %v27 = vld [vmem:[#allocation2 + $0x8] sm:$0xff]
    %v28 = vld [vmem:[#allocation2 + $0x10] sm:$0xff]
    %v29 = vld [vmem:[#allocation2 + $0x18] sm:$0xff]
    %v30 = vld [vmem:[#allocation2 + $0x20] sm:$0xff]
    %v31 = vld [vmem:[#allocation2 + $0x28] sm:$0xff]
    %v32 = vld [vmem:[#allocation2 + $0x30] sm:$0xff]
    %v33 = vld [vmem:[#allocation2 + $0x38] sm:$0xff]
    %v34 = vld [vmem:[#allocation2 + $0x40] sm:$0xff]
    %v35 = vld [vmem:[#allocation2 + $0x48] sm:$0xff]
    %v36 = vld [vmem:[#allocation2 + $0x50] sm:$0xff]
    %v37 = vld [vmem:[#allocation2 + $0x58] sm:$0xff]
    %v38 = vld [vmem:[#allocation2 + $0x60] sm:$0xff]
    %v39 = vld [vmem:[#allocation2 + $0x68] sm:$0xff]
    %v40 = vld [vmem:[#allocation2 + $0x70] sm:$0xff]
    %v41 = vld [vmem:[#allocation2 + $0x78] sm:$0xff]
    %v42 = vld [vmem:[#allocation2 + $0x80] sm:$0xff]
    %v43 = vld [vmem:[#allocation2 + $0x88] sm:$0xff]
    %v44 = vld [vmem:[#allocation2 + $0x90] sm:$0xff]
    %v45 = vld [vmem:[#allocation2 + $0x98] sm:$0xff]
    %v46 = vld [vmem:[#allocation2 + $0xa0] sm:$0xff]
    %v47 = vld [vmem:[#allocation2 + $0xa8] sm:$0xff]
    %v48 = vld [vmem:[#allocation2 + $0xb0] sm:$0xff]
    %v49 = vld [vmem:[#allocation2 + $0xb8] sm:$0xff]
    %v50 = vld [vmem:[#allocation2 + $0xc0] sm:$0xff]
    %v51 = vld [vmem:[#allocation2 + $0xc8] sm:$0xff]
    %v52 = vld [vmem:[#allocation2 + $0xd0] sm:$0xff]
    %v53 = vld [vmem:[#allocation2 + $0xd8] sm:$0xff]
    %v54 = vld [vmem:[#allocation2 + $0xe0] sm:$0xff]
    %v55 = vld [vmem:[#allocation2 + $0xe8] sm:$0xff]
    %v56 = vld [vmem:[#allocation2 + $0xf0] sm:$0xff]
    %v57 = vld [vmem:[#allocation2 + $0xf8] sm:$0xff]
    %v58 = vld [vmem:[#allocation2 + $0x100] sm:$0xff]
    %v59 = vld [vmem:[#allocation2 + $0x108] sm:$0xff]
    %v60 = vld [vmem:[#allocation2 + $0x110] sm:$0xff]
    %v61 = vld [vmem:[#allocation2 + $0x118] sm:$0xff]
    %v62 = vld [vmem:[#allocation2 + $0x120] sm:$0xff]
    %v63 = vld [vmem:[#allocation2 + $0x128] sm:$0xff]
    %v64 = vld [vmem:[#allocation2 + $0x130] sm:$0xff]
    %v65 = vld [vmem:[#allocation2 + $0x138] sm:$0xff]
    %v66 = vld [vmem:[#allocation2 + $0x140] sm:$0xff]
    %v67 = vld [vmem:[#allocation2 + $0x148] sm:$0xff]
    %v68 = vld [vmem:[#allocation2 + $0x150] sm:$0xff]
    %v69 = vld [vmem:[#allocation2 + $0x158] sm:$0xff]
    %v70 = vld [vmem:[#allocation2 + $0x160] sm:$0xff]
    %v71 = vld [vmem:[#allocation2 + $0x168] sm:$0xff]
    %v72 = vld [vmem:[#allocation2 + $0x170] sm:$0xff]
    %v73 = vld [vmem:[#allocation2 + $0x178] sm:$0xff]
    %v74 = vld [vmem:[#allocation2 + $0x180] sm:$0xff]
    %v75 = vld [vmem:[#allocation2 + $0x188] sm:$0xff]
    %v76 = vld [vmem:[#allocation2 + $0x190] sm:$0xff]
    %v77 = vld [vmem:[#allocation2 + $0x198] sm:$0xff]
    %v78 = vld [vmem:[#allocation2 + $0x1a0] sm:$0xff]
    %v79 = vld [vmem:[#allocation2 + $0x1a8] sm:$0xff]
    %v80 = vld [vmem:[#allocation2 + $0x1b0] sm:$0xff]
    %v81 = vld [vmem:[#allocation2 + $0x1b8] sm:$0xff]
    %v82 = vld [vmem:[#allocation2 + $0x1c0] sm:$0xff]
    %v83 = vld [vmem:[#allocation2 + $0x1c8] sm:$0xff]
    %v84 = vld [vmem:[#allocation2 + $0x1d0] sm:$0xff]
    %v85 = vld [vmem:[#allocation2 + $0x1d8] sm:$0xff]
    %v86 = vld [vmem:[#allocation2 + $0x1e0] sm:$0xff]
    %v87 = vld [vmem:[#allocation2 + $0x1e8] sm:$0xff]
    %v88 = vld [vmem:[#allocation2 + $0x1f0] sm:$0xff]
    %v89 = vld [vmem:[#allocation2 + $0x1f8] sm:$0xff]
    %v90 = vld [vmem:[#allocation2 + $0x200] sm:$0xff]
    %v91 = vld [vmem:[#allocation2 + $0x208] sm:$0xff]
    %v92 = vld [vmem:[#allocation2 + $0x210] sm:$0xff]
    %v93 = vld [vmem:[#allocation2 + $0x218] sm:$0xff]
    %v94 = vld [vmem:[#allocation2 + $0x220] sm:$0xff]
    %v95 = vld [vmem:[#allocation2 + $0x228] sm:$0xff]
    %v96 = vld [vmem:[#allocation2 + $0x230] sm:$0xff]
    %v97 = vld [vmem:[#allocation2 + $0x238] sm:$0xff]
    %v98 = vld [vmem:[#allocation2 + $0x240] sm:$0xff]
    %v99 = vld [vmem:[#allocation2 + $0x248] sm:$0xff]
    %v100 = vld [vmem:[#allocation2 + $0x250] sm:$0xff]
    %v101 = vld [vmem:[#allocation2 + $0x258] sm:$0xff]
    %v102 = vld [vmem:[#allocation2 + $0x260] sm:$0xff]
    %v103 = vld [vmem:[#allocation2 + $0x268] sm:$0xff]
    %v104 = vld [vmem:[#allocation2 + $0x270] sm:$0xff]
    %v105 = vld [vmem:[#allocation2 + $0x278] sm:$0xff]
    %v106 = vld [vmem:[#allocation2 + $0x280] sm:$0xff]
    %v107 = vld [vmem:[#allocation2 + $0x288] sm:$0xff]
    %v108 = vld [vmem:[#allocation2 + $0x290] sm:$0xff]
    %v109 = vld [vmem:[#allocation2 + $0x298] sm:$0xff]
    %v110 = vld [vmem:[#allocation2 + $0x2a0] sm:$0xff]
    %v111 = vld [vmem:[#allocation2 + $0x2a8] sm:$0xff]
    %v112 = vld [vmem:[#allocation2 + $0x2b0] sm:$0xff]
    %v113 = vld [vmem:[#allocation2 + $0x2b8] sm:$0xff]
    %v114 = vld [vmem:[#allocation2 + $0x2c0] sm:$0xff]
    %v115 = vld [vmem:[#allocation2 + $0x2c8] sm:$0xff]
    %v116 = vld [vmem:[#allocation2 + $0x2d0] sm:$0xff]
    %v117 = vld [vmem:[#allocation2 + $0x2d8] sm:$0xff]
    %v118 = vld [vmem:[#allocation2 + $0x2e0] sm:$0xff]
    %v119 = vld [vmem:[#allocation2 + $0x2e8] sm:$0xff]
    %v120 = vld [vmem:[#allocation2 + $0x2f0] sm:$0xff]
    %v121 = vld [vmem:[#allocation2 + $0x2f8] sm:$0xff]
    %v122 = vld [vmem:[#allocation2 + $0x300] sm:$0xff]
    %v123 = vld [vmem:[#allocation2 + $0x308] sm:$0xff]
    %v124 = vld [vmem:[#allocation2 + $0x310] sm:$0xff]
    %v125 = vld [vmem:[#allocation2 + $0x318] sm:$0xff]
    %v126 = vld [vmem:[#allocation2 + $0x320] sm:$0xff]
    %v127 = vld [vmem:[#allocation2 + $0x328] sm:$0xff]
    %v128 = vld [vmem:[#allocation2 + $0x330] sm:$0xff]
    %v129 = vld [vmem:[#allocation2 + $0x338] sm:$0xff]
    %v130 = vld [vmem:[#allocation2 + $0x340] sm:$0xff]
    %v131 = vld [vmem:[#allocation2 + $0x348] sm:$0xff]
    %v132 = vld [vmem:[#allocation2 + $0x350] sm:$0xff]
    %v133 = vld [vmem:[#allocation2 + $0x358] sm:$0xff]
    %v134 = vld [vmem:[#allocation2 + $0x360] sm:$0xff]
    %v135 = vld [vmem:[#allocation2 + $0x368] sm:$0xff]
    %v136 = vld [vmem:[#allocation2 + $0x370] sm:$0xff]
    %v137 = vld [vmem:[#allocation2 + $0x378] sm:$0xff]
    %v138 = vld [vmem:[#allocation2 + $0x380] sm:$0xff]
    %v139 = vld [vmem:[#allocation2 + $0x388] sm:$0xff]
    %v140 = vld [vmem:[#allocation2 + $0x390] sm:$0xff]
    %v141 = vld [vmem:[#allocation2 + $0x398] sm:$0xff]
    %v142 = vld [vmem:[#allocation2 + $0x3a0] sm:$0xff]
    %v143 = vld [vmem:[#allocation2 + $0x3a8] sm:$0xff]
    %v144 = vld [vmem:[#allocation2 + $0x3b0] sm:$0xff]
    %v145 = vld [vmem:[#allocation2 + $0x3b8] sm:$0xff]
    %v146 = vld [vmem:[#allocation2 + $0x3c0] sm:$0xff]
    %v147 = vld [vmem:[#allocation2 + $0x3c8] sm:$0xff]
    %v148 = vld [vmem:[#allocation2 + $0x3d0] sm:$0xff]
    %v149 = vld [vmem:[#allocation2 + $0x3d8] sm:$0xff]
    %v150 = vld [vmem:[#allocation2 + $0x3e0] sm:$0xff]
    %v151 = vld [vmem:[#allocation2 + $0x3e8] sm:$0xff]
    %v152 = vld [vmem:[#allocation2 + $0x3f0] sm:$0xff]
    %v153 = vld [vmem:[#allocation2 + $0x3f8] sm:$0xff]
    %v154 = vld [vmem:[#allocation2 + $0x400] sm:$0xff]
    %v155 = vld [vmem:[#allocation2 + $0x408] sm:$0xff]
    %v156 = vld [vmem:[#allocation2 + $0x410] sm:$0xff]
    %v157 = vld [vmem:[#allocation2 + $0x418] sm:$0xff]
    %v158 = vld [vmem:[#allocation2 + $0x420] sm:$0xff]
    %v159 = vld [vmem:[#allocation2 + $0x428] sm:$0xff]
    %v160 = vld [vmem:[#allocation2 + $0x430] sm:$0xff]
    %v161 = vld [vmem:[#allocation2 + $0x438] sm:$0xff]
    %v162 = vld [vmem:[#allocation2 + $0x440] sm:$0xff]
    %v163 = vld [vmem:[#allocation2 + $0x448] sm:$0xff]
    %v164 = vld [vmem:[#allocation2 + $0x450] sm:$0xff]
    %v165 = vld [vmem:[#allocation2 + $0x458] sm:$0xff]
    %v166 = vld [vmem:[#allocation2 + $0x460] sm:$0xff]
    %v167 = vld [vmem:[#allocation2 + $0x468] sm:$0xff]
    %v168 = vld [vmem:[#allocation2 + $0x470] sm:$0xff]
    %v169 = vld [vmem:[#allocation2 + $0x478] sm:$0xff]
    %vm170 = vcmp.ge.f32.partialorder %v26, 0.0
    %vm171 = vcmp.ge.f32.partialorder %v27, 0.0
    %vm172 = vcmp.ge.f32.partialorder %v28, 0.0
    %vm173 = vcmp.ge.f32.partialorder %v29, 0.0
    %vm174 = vcmp.ge.f32.partialorder %v30, 0.0
    %vm175 = vcmp.ge.f32.partialorder %v31, 0.0
    %vm176 = vcmp.ge.f32.partialorder %v32, 0.0
    %vm177 = vcmp.ge.f32.partialorder %v33, 0.0
    %vm178 = vcmp.ge.f32.partialorder %v34, 0.0
    %vm179 = vcmp.ge.f32.partialorder %v35, 0.0
    %vm180 = vcmp.ge.f32.partialorder %v36, 0.0
    %vm181 = vcmp.ge.f32.partialorder %v37, 0.0
    %vm182 = vcmp.ge.f32.partialorder %v38, 0.0
    %vm183 = vcmp.ge.f32.partialorder %v39, 0.0
    %vm184 = vcmp.ge.f32.partialorder %v40, 0.0
    %vm185 = vcmp.ge.f32.partialorder %v41, 0.0
    %vm186 = vcmp.ge.f32.partialorder %v42, 0.0
    %vm187 = vcmp.ge.f32.partialorder %v43, 0.0
    %vm188 = vcmp.ge.f32.partialorder %v44, 0.0
    %vm189 = vcmp.ge.f32.partialorder %v45, 0.0
    %vm190 = vcmp.ge.f32.partialorder %v46, 0.0
    %vm191 = vcmp.ge.f32.partialorder %v47, 0.0
    %vm192 = vcmp.ge.f32.partialorder %v48, 0.0
    %vm193 = vcmp.ge.f32.partialorder %v49, 0.0
    %vm194 = vcmp.ge.f32.partialorder %v50, 0.0
    %vm195 = vcmp.ge.f32.partialorder %v51, 0.0
    %vm196 = vcmp.ge.f32.partialorder %v52, 0.0
    %vm197 = vcmp.ge.f32.partialorder %v53, 0.0
    %vm198 = vcmp.ge.f32.partialorder %v54, 0.0
    %vm199 = vcmp.ge.f32.partialorder %v55, 0.0
    %vm200 = vcmp.ge.f32.partialorder %v56, 0.0
    %vm201 = vcmp.ge.f32.partialorder %v57, 0.0
    %vm202 = vcmp.ge.f32.partialorder %v58, 0.0
    %vm203 = vcmp.ge.f32.partialorder %v59, 0.0
    %vm204 = vcmp.ge.f32.partialorder %v60, 0.0
    %vm205 = vcmp.ge.f32.partialorder %v61, 0.0
    %vm206 = vcmp.ge.f32.partialorder %v62, 0.0
    %vm207 = vcmp.ge.f32.partialorder %v63, 0.0
    %vm208 = vcmp.ge.f32.partialorder %v64, 0.0
    %vm209 = vcmp.ge.f32.partialorder %v65, 0.0
    %vm210 = vcmp.ge.f32.partialorder %v66, 0.0
    %vm211 = vcmp.ge.f32.partialorder %v67, 0.0
    %vm212 = vcmp.ge.f32.partialorder %v68, 0.0
    %vm213 = vcmp.ge.f32.partialorder %v69, 0.0
    %vm214 = vcmp.ge.f32.partialorder %v70, 0.0
    %vm215 = vcmp.ge.f32.partialorder %v71, 0.0
    %vm216 = vcmp.ge.f32.partialorder %v72, 0.0
    %vm217 = vcmp.ge.f32.partialorder %v73, 0.0
    %vm218 = vcmp.ge.f32.partialorder %v74, 0.0
    %vm219 = vcmp.ge.f32.partialorder %v75, 0.0
    %vm220 = vcmp.ge.f32.partialorder %v76, 0.0
    %vm221 = vcmp.ge.f32.partialorder %v77, 0.0
    %vm222 = vcmp.ge.f32.partialorder %v78, 0.0
    %vm223 = vcmp.ge.f32.partialorder %v79, 0.0
    %vm224 = vcmp.ge.f32.partialorder %v80, 0.0
    %vm225 = vcmp.ge.f32.partialorder %v81, 0.0
    %vm226 = vcmp.ge.f32.partialorder %v82, 0.0
    %vm227 = vcmp.ge.f32.partialorder %v83, 0.0
    %vm228 = vcmp.ge.f32.partialorder %v84, 0.0
    %vm229 = vcmp.ge.f32.partialorder %v85, 0.0
    %vm230 = vcmp.ge.f32.partialorder %v86, 0.0
    %vm231 = vcmp.ge.f32.partialorder %v87, 0.0
    %vm232 = vcmp.ge.f32.partialorder %v88, 0.0
    %vm233 = vcmp.ge.f32.partialorder %v89, 0.0
    %vm234 = vcmp.ge.f32.partialorder %v90, 0.0
    %vm235 = vcmp.ge.f32.partialorder %v91, 0.0
    %vm236 = vcmp.ge.f32.partialorder %v92, 0.0
    %vm237 = vcmp.ge.f32.partialorder %v93, 0.0
    %vm238 = vcmp.ge.f32.partialorder %v94, 0.0
    %vm239 = vcmp.ge.f32.partialorder %v95, 0.0
    %vm240 = vcmp.ge.f32.partialorder %v96, 0.0
    %vm241 = vcmp.ge.f32.partialorder %v97, 0.0
    %vm242 = vcmp.ge.f32.partialorder %v98, 0.0
    %vm243 = vcmp.ge.f32.partialorder %v99, 0.0
    %vm244 = vcmp.ge.f32.partialorder %v100, 0.0
    %vm245 = vcmp.ge.f32.partialorder %v101, 0.0
    %vm246 = vcmp.ge.f32.partialorder %v102, 0.0
    %vm247 = vcmp.ge.f32.partialorder %v103, 0.0
    %vm248 = vcmp.ge.f32.partialorder %v104, 0.0
    %vm249 = vcmp.ge.f32.partialorder %v105, 0.0
    %vm250 = vcmp.ge.f32.partialorder %v106, 0.0
    %vm251 = vcmp.ge.f32.partialorder %v107, 0.0
    %vm252 = vcmp.ge.f32.partialorder %v108, 0.0
    %vm253 = vcmp.ge.f32.partialorder %v109, 0.0
    %vm254 = vcmp.ge.f32.partialorder %v110, 0.0
    %vm255 = vcmp.ge.f32.partialorder %v111, 0.0
    %vm256 = vcmp.ge.f32.partialorder %v112, 0.0
    %vm257 = vcmp.ge.f32.partialorder %v113, 0.0
    %vm258 = vcmp.ge.f32.partialorder %v114, 0.0
    %vm259 = vcmp.ge.f32.partialorder %v115, 0.0
    %vm260 = vcmp.ge.f32.partialorder %v116, 0.0
    %vm261 = vcmp.ge.f32.partialorder %v117, 0.0
    %vm262 = vcmp.ge.f32.partialorder %v118, 0.0
    %vm263 = vcmp.ge.f32.partialorder %v119, 0.0
    %vm264 = vcmp.ge.f32.partialorder %v120, 0.0
    %vm265 = vcmp.ge.f32.partialorder %v121, 0.0
    %vm266 = vcmp.ge.f32.partialorder %v122, 0.0
    %vm267 = vcmp.ge.f32.partialorder %v123, 0.0
    %vm268 = vcmp.ge.f32.partialorder %v124, 0.0
    %vm269 = vcmp.ge.f32.partialorder %v125, 0.0
    %vm270 = vcmp.ge.f32.partialorder %v126, 0.0
    %vm271 = vcmp.ge.f32.partialorder %v127, 0.0
    %vm272 = vcmp.ge.f32.partialorder %v128, 0.0
    %vm273 = vcmp.ge.f32.partialorder %v129, 0.0
    %vm274 = vcmp.ge.f32.partialorder %v130, 0.0
    %vm275 = vcmp.ge.f32.partialorder %v131, 0.0
    %vm276 = vcmp.ge.f32.partialorder %v132, 0.0
    %vm277 = vcmp.ge.f32.partialorder %v133, 0.0
    %vm278 = vcmp.ge.f32.partialorder %v134, 0.0
    %vm279 = vcmp.ge.f32.partialorder %v135, 0.0
    %vm280 = vcmp.ge.f32.partialorder %v136, 0.0
    %vm281 = vcmp.ge.f32.partialorder %v137, 0.0
    %vm282 = vcmp.ge.f32.partialorder %v138, 0.0
    %vm283 = vcmp.ge.f32.partialorder %v139, 0.0
    %vm284 = vcmp.ge.f32.partialorder %v140, 0.0
    %vm285 = vcmp.ge.f32.partialorder %v141, 0.0
    %vm286 = vcmp.ge.f32.partialorder %v142, 0.0
    %vm287 = vcmp.ge.f32.partialorder %v143, 0.0
    %vm288 = vcmp.ge.f32.partialorder %v144, 0.0
    %vm289 = vcmp.ge.f32.partialorder %v145, 0.0
    %vm290 = vcmp.ge.f32.partialorder %v146, 0.0
    %vm291 = vcmp.ge.f32.partialorder %v147, 0.0
    %vm292 = vcmp.ge.f32.partialorder %v148, 0.0
    %vm293 = vcmp.ge.f32.partialorder %v149, 0.0
    %vm294 = vcmp.ge.f32.partialorder %v150, 0.0
    %vm295 = vcmp.ge.f32.partialorder %v151, 0.0
    %vm296 = vcmp.ge.f32.partialorder %v152, 0.0
    %vm297 = vcmp.ge.f32.partialorder %v153, 0.0
    %vm298 = vcmp.ge.f32.partialorder %v154, 0.0
    %vm299 = vcmp.ge.f32.partialorder %v155, 0.0
    %vm300 = vcmp.ge.f32.partialorder %v156, 0.0
    %vm301 = vcmp.ge.f32.partialorder %v157, 0.0
    %vm302 = vcmp.ge.f32.partialorder %v158, 0.0
    %vm303 = vcmp.ge.f32.partialorder %v159, 0.0
    %vm304 = vcmp.ge.f32.partialorder %v160, 0.0
    %vm305 = vcmp.ge.f32.partialorder %v161, 0.0
    %vm306 = vcmp.ge.f32.partialorder %v162, 0.0
    %vm307 = vcmp.ge.f32.partialorder %v163, 0.0
    %vm308 = vcmp.ge.f32.partialorder %v164, 0.0
    %vm309 = vcmp.ge.f32.partialorder %v165, 0.0
    %vm310 = vcmp.ge.f32.partialorder %v166, 0.0
    %vm311 = vcmp.ge.f32.partialorder %v167, 0.0
    %vm312 = vcmp.ge.f32.partialorder %v168, 0.0
    %vm313 = vcmp.ge.f32.partialorder %v169, 0.0
    %v314 = vmul.f32 %v26, 0.01
    %v315 = vmul.f32 %v27, 0.01
    %v316 = vmul.f32 %v28, 0.01
    %v317 = vmul.f32 %v29, 0.01
    %v318 = vmul.f32 %v30, 0.01
    %v319 = vmul.f32 %v31, 0.01
    %v320 = vmul.f32 %v32, 0.01
    %v321 = vmul.f32 %v33, 0.01
    %v322 = vmul.f32 %v34, 0.01
    %v323 = vmul.f32 %v35, 0.01
    %v324 = vmul.f32 %v36, 0.01
    %v325 = vmul.f32 %v37, 0.01
    %v326 = vmul.f32 %v38, 0.01
    %v327 = vmul.f32 %v39, 0.01
    %v328 = vmul.f32 %v40, 0.01
    %v329 = vmul.f32 %v41, 0.01
    %v330 = vmul.f32 %v42, 0.01
    %v331 = vmul.f32 %v43, 0.01
    %v332 = vmul.f32 %v44, 0.01
    %v333 = vmul.f32 %v45, 0.01
    %v334 = vmul.f32 %v46, 0.01
    %v335 = vmul.f32 %v47, 0.01
    %v336 = vmul.f32 %v48, 0.01
    %v337 = vmul.f32 %v49, 0.01
    %v338 = vmul.f32 %v50, 0.01
    %v339 = vmul.f32 %v51, 0.01
    %v340 = vmul.f32 %v52, 0.01
    %v341 = vmul.f32 %v53, 0.01
    %v342 = vmul.f32 %v54, 0.01
    %v343 = vmul.f32 %v55, 0.01
    %v344 = vmul.f32 %v56, 0.01
    %v345 = vmul.f32 %v57, 0.01
    %v346 = vmul.f32 %v58, 0.01
    %v347 = vmul.f32 %v59, 0.01
    %v348 = vmul.f32 %v60, 0.01
    %v349 = vmul.f32 %v61, 0.01
    %v350 = vmul.f32 %v62, 0.01
    %v351 = vmul.f32 %v63, 0.01
    %v352 = vmul.f32 %v64, 0.01
    %v353 = vmul.f32 %v65, 0.01
    %v354 = vmul.f32 %v66, 0.01
    %v355 = vmul.f32 %v67, 0.01
    %v356 = vmul.f32 %v68, 0.01
    %v357 = vmul.f32 %v69, 0.01
    %v358 = vmul.f32 %v70, 0.01
    %v359 = vmul.f32 %v71, 0.01
    %v360 = vmul.f32 %v72, 0.01
    %v361 = vmul.f32 %v73, 0.01
    %v362 = vmul.f32 %v74, 0.01
    %v363 = vmul.f32 %v75, 0.01
    %v364 = vmul.f32 %v76, 0.01
    %v365 = vmul.f32 %v77, 0.01
    %v366 = vmul.f32 %v78, 0.01
    %v367 = vmul.f32 %v79, 0.01
    %v368 = vmul.f32 %v80, 0.01
    %v369 = vmul.f32 %v81, 0.01
    %v370 = vmul.f32 %v82, 0.01
    %v371 = vmul.f32 %v83, 0.01
    %v372 = vmul.f32 %v84, 0.01
    %v373 = vmul.f32 %v85, 0.01
    %v374 = vmul.f32 %v86, 0.01
    %v375 = vmul.f32 %v87, 0.01
    %v376 = vmul.f32 %v88, 0.01
    %v377 = vmul.f32 %v89, 0.01
    %v378 = vmul.f32 %v90, 0.01
    %v379 = vmul.f32 %v91, 0.01
    %v380 = vmul.f32 %v92, 0.01
    %v381 = vmul.f32 %v93, 0.01
    %v382 = vmul.f32 %v94, 0.01
    %v383 = vmul.f32 %v95, 0.01
    %v384 = vmul.f32 %v96, 0.01
    %v385 = vmul.f32 %v97, 0.01
    %v386 = vmul.f32 %v98, 0.01
    %v387 = vmul.f32 %v99, 0.01
    %v388 = vmul.f32 %v100, 0.01
    %v389 = vmul.f32 %v101, 0.01
    %v390 = vmul.f32 %v102, 0.01
    %v391 = vmul.f32 %v103, 0.01
    %v392 = vmul.f32 %v104, 0.01
    %v393 = vmul.f32 %v105, 0.01
    %v394 = vmul.f32 %v106, 0.01
    %v395 = vmul.f32 %v107, 0.01
    %v396 = vmul.f32 %v108, 0.01
    %v397 = vmul.f32 %v109, 0.01
    %v398 = vmul.f32 %v110, 0.01
    %v399 = vmul.f32 %v111, 0.01
    %v400 = vmul.f32 %v112, 0.01
    %v401 = vmul.f32 %v113, 0.01
    %v402 = vmul.f32 %v114, 0.01
    %v403 = vmul.f32 %v115, 0.01
    %v404 = vmul.f32 %v116, 0.01
    %v405 = vmul.f32 %v117, 0.01
    %v406 = vmul.f32 %v118, 0.01
    %v407 = vmul.f32 %v119, 0.01
    %v408 = vmul.f32 %v120, 0.01
    %v409 = vmul.f32 %v121, 0.01
    %v410 = vmul.f32 %v122, 0.01
    %v411 = vmul.f32 %v123, 0.01
    %v412 = vmul.f32 %v124, 0.01
    %v413 = vmul.f32 %v125, 0.01
    %v414 = vmul.f32 %v126, 0.01
    %v415 = vmul.f32 %v127, 0.01
    %v416 = vmul.f32 %v128, 0.01
    %v417 = vmul.f32 %v129, 0.01
    %v418 = vmul.f32 %v130, 0.01
    %v419 = vmul.f32 %v131, 0.01
    %v420 = vmul.f32 %v132, 0.01
    %v421 = vmul.f32 %v133, 0.01
    %v422 = vmul.f32 %v134, 0.01
    %v423 = vmul.f32 %v135, 0.01
    %v424 = vmul.f32 %v136, 0.01
    %v425 = vmul.f32 %v137, 0.01
    %v426 = vmul.f32 %v138, 0.01
    %v427 = vmul.f32 %v139, 0.01
    %v428 = vmul.f32 %v140, 0.01
    %v429 = vmul.f32 %v141, 0.01
    %v430 = vmul.f32 %v142, 0.01
    %v431 = vmul.f32 %v143, 0.01
    %v432 = vmul.f32 %v144, 0.01
    %v433 = vmul.f32 %v145, 0.01
    %v434 = vmul.f32 %v146, 0.01
    %v435 = vmul.f32 %v147, 0.01
    %v436 = vmul.f32 %v148, 0.01
    %v437 = vmul.f32 %v149, 0.01
    %v438 = vmul.f32 %v150, 0.01
    %v439 = vmul.f32 %v151, 0.01
    %v440 = vmul.f32 %v152, 0.01
    %v441 = vmul.f32 %v153, 0.01
    %v442 = vmul.f32 %v154, 0.01
    %v443 = vmul.f32 %v155, 0.01
    %v444 = vmul.f32 %v156, 0.01
    %v445 = vmul.f32 %v157, 0.01
    %v446 = vmul.f32 %v158, 0.01
    %v447 = vmul.f32 %v159, 0.01
    %v448 = vmul.f32 %v160, 0.01
    %v449 = vmul.f32 %v161, 0.01
    %v450 = vmul.f32 %v162, 0.01
    %v451 = vmul.f32 %v163, 0.01
    %v452 = vmul.f32 %v164, 0.01
    %v453 = vmul.f32 %v165, 0.01
    %v454 = vmul.f32 %v166, 0.01
    %v455 = vmul.f32 %v167, 0.01
    %v456 = vmul.f32 %v168, 0.01
    %v457 = vmul.f32 %v169, 0.01
    %v458 = vsel %vm170, %v26, %v314
    %v459 = vsel %vm171, %v27, %v315
    %v460 = vsel %vm172, %v28, %v316
    %v461 = vsel %vm173, %v29, %v317
    %v462 = vsel %vm174, %v30, %v318
    %v463 = vsel %vm175, %v31, %v319
    %v464 = vsel %vm176, %v32, %v320
    %v465 = vsel %vm177, %v33, %v321
    %v466 = vsel %vm178, %v34, %v322
    %v467 = vsel %vm179, %v35, %v323
    %v468 = vsel %vm180, %v36, %v324
    %v469 = vsel %vm181, %v37, %v325
    %v470 = vsel %vm182, %v38, %v326
    %v471 = vsel %vm183, %v39, %v327
    %v472 = vsel %vm184, %v40, %v328
    %v473 = vsel %vm185, %v41, %v329
    %v474 = vsel %vm186, %v42, %v330
    %v475 = vsel %vm187, %v43, %v331
    %v476 = vsel %vm188, %v44, %v332
    %v477 = vsel %vm189, %v45, %v333
    %v478 = vsel %vm190, %v46, %v334
    %v479 = vsel %vm191, %v47, %v335
    %v480 = vsel %vm192, %v48, %v336
    %v481 = vsel %vm193, %v49, %v337
    %v482 = vsel %vm194, %v50, %v338
    %v483 = vsel %vm195, %v51, %v339
    %v484 = vsel %vm196, %v52, %v340
    %v485 = vsel %vm197, %v53, %v341
    %v486 = vsel %vm198, %v54, %v342
    %v487 = vsel %vm199, %v55, %v343
    %v488 = vsel %vm200, %v56, %v344
    %v489 = vsel %vm201, %v57, %v345
    %v490 = vsel %vm202, %v58, %v346
    %v491 = vsel %vm203, %v59, %v347
    %v492 = vsel %vm204, %v60, %v348
    %v493 = vsel %vm205, %v61, %v349
    %v494 = vsel %vm206, %v62, %v350
    %v495 = vsel %vm207, %v63, %v351
    %v496 = vsel %vm208, %v64, %v352
    %v497 = vsel %vm209, %v65, %v353
    %v498 = vsel %vm210, %v66, %v354
    %v499 = vsel %vm211, %v67, %v355
    %v500 = vsel %vm212, %v68, %v356
    %v501 = vsel %vm213, %v69, %v357
    %v502 = vsel %vm214, %v70, %v358
    %v503 = vsel %vm215, %v71, %v359
    %v504 = vsel %vm216, %v72, %v360
    %v505 = vsel %vm217, %v73, %v361
    %v506 = vsel %vm218, %v74, %v362
    %v507 = vsel %vm219, %v75, %v363
    %v508 = vsel %vm220, %v76, %v364
    %v509 = vsel %vm221, %v77, %v365
    %v510 = vsel %vm222, %v78, %v366
    %v511 = vsel %vm223, %v79, %v367
    %v512 = vsel %vm224, %v80, %v368
    %v513 = vsel %vm225, %v81, %v369
    %v514 = vsel %vm226, %v82, %v370
    %v515 = vsel %vm227, %v83, %v371
    %v516 = vsel %vm228, %v84, %v372
    %v517 = vsel %vm229, %v85, %v373
    %v518 = vsel %vm230, %v86, %v374
    %v519 = vsel %vm231, %v87, %v375
    %v520 = vsel %vm232, %v88, %v376
    %v521 = vsel %vm233, %v89, %v377
    %v522 = vsel %vm234, %v90, %v378
    %v523 = vsel %vm235, %v91, %v379
    %v524 = vsel %vm236, %v92, %v380
    %v525 = vsel %vm237, %v93, %v381
    %v526 = vsel %vm238, %v94, %v382
    %v527 = vsel %vm239, %v95, %v383
    %v528 = vsel %vm240, %v96, %v384
    %v529 = vsel %vm241, %v97, %v385
    %v530 = vsel %vm242, %v98, %v386
    %v531 = vsel %vm243, %v99, %v387
    %v532 = vsel %vm244, %v100, %v388
    %v533 = vsel %vm245, %v101, %v389
    %v534 = vsel %vm246, %v102, %v390
    %v535 = vsel %vm247, %v103, %v391
    %v536 = vsel %vm248, %v104, %v392
    %v537 = vsel %vm249, %v105, %v393
    %v538 = vsel %vm250, %v106, %v394
    %v539 = vsel %vm251, %v107, %v395
    %v540 = vsel %vm252, %v108, %v396
    %v541 = vsel %vm253, %v109, %v397
    %v542 = vsel %vm254, %v110, %v398
    %v543 = vsel %vm255, %v111, %v399
    %v544 = vsel %vm256, %v112, %v400
    %v545 = vsel %vm257, %v113, %v401
    %v546 = vsel %vm258, %v114, %v402
    %v547 = vsel %vm259, %v115, %v403
    %v548 = vsel %vm260, %v116, %v404
    %v549 = vsel %vm261, %v117, %v405
    %v550 = vsel %vm262, %v118, %v406
    %v551 = vsel %vm263, %v119, %v407
    %v552 = vsel %vm264, %v120, %v408
    %v553 = vsel %vm265, %v121, %v409
    %v554 = vsel %vm266, %v122, %v410
    %v555 = vsel %vm267, %v123, %v411
    %v556 = vsel %vm268, %v124, %v412
    %v557 = vsel %vm269, %v125, %v413
    %v558 = vsel %vm270, %v126, %v414
    %v559 = vsel %vm271, %v127, %v415
    %v560 = vsel %vm272, %v128, %v416
    %v561 = vsel %vm273, %v129, %v417
    %v562 = vsel %vm274, %v130, %v418
    %v563 = vsel %vm275, %v131, %v419
    %v564 = vsel %vm276, %v132, %v420
    %v565 = vsel %vm277, %v133, %v421
    %v566 = vsel %vm278, %v134, %v422
    %v567 = vsel %vm279, %v135, %v423
    %v568 = vsel %vm280, %v136, %v424
    %v569 = vsel %vm281, %v137, %v425
    %v570 = vsel %vm282, %v138, %v426
    %v571 = vsel %vm283, %v139, %v427
    %v572 = vsel %vm284, %v140, %v428
    %v573 = vsel %vm285, %v141, %v429
    %v574 = vsel %vm286, %v142, %v430
    %v575 = vsel %vm287, %v143, %v431
    %v576 = vsel %vm288, %v144, %v432
    %v577 = vsel %vm289, %v145, %v433
    %v578 = vsel %vm290, %v146, %v434
    %v579 = vsel %vm291, %v147, %v435
    %v580 = vsel %vm292, %v148, %v436
    %v581 = vsel %vm293, %v149, %v437
    %v582 = vsel %vm294, %v150, %v438
    %v583 = vsel %vm295, %v151, %v439
    %v584 = vsel %vm296, %v152, %v440
    %v585 = vsel %vm297, %v153, %v441
    %v586 = vsel %vm298, %v154, %v442
    %v587 = vsel %vm299, %v155, %v443
    %v588 = vsel %vm300, %v156, %v444
    %v589 = vsel %vm301, %v157, %v445
    %v590 = vsel %vm302, %v158, %v446
    %v591 = vsel %vm303, %v159, %v447
    %v592 = vsel %vm304, %v160, %v448
    %v593 = vsel %vm305, %v161, %v449
    %v594 = vsel %vm306, %v162, %v450
    %v595 = vsel %vm307, %v163, %v451
    %v596 = vsel %vm308, %v164, %v452
    %v597 = vsel %vm309, %v165, %v453
    %v598 = vsel %vm310, %v166, %v454
    %v599 = vsel %vm311, %v167, %v455
    %v600 = vsel %vm312, %v168, %v456
    %v601 = vsel %vm313, %v169, %v457
    %602 = vst [vmem:[#allocation5] sm:$0xff] %v458
    %603 = vst [vmem:[#allocation5 + $0x8] sm:$0xff] %v459
    %604 = vst [vmem:[#allocation5 + $0x10] sm:$0xff] %v460
    %605 = vst [vmem:[#allocation5 + $0x18] sm:$0xff] %v461
    %606 = vst [vmem:[#allocation5 + $0x20] sm:$0xff] %v462
    %607 = vst [vmem:[#allocation5 + $0x28] sm:$0xff] %v463
    %608 = vst [vmem:[#allocation5 + $0x30] sm:$0xff] %v464
    %609 = vst [vmem:[#allocation5 + $0x38] sm:$0xff] %v465
    %610 = vst [vmem:[#allocation5 + $0x40] sm:$0xff] %v466
    %611 = vst [vmem:[#allocation5 + $0x48] sm:$0xff] %v467
    %612 = vst [vmem:[#allocation5 + $0x50] sm:$0xff] %v468
    %613 = vst [vmem:[#allocation5 + $0x58] sm:$0xff] %v469
    %614 = vst [vmem:[#allocation5 + $0x60] sm:$0xff] %v470
    %615 = vst [vmem:[#allocation5 + $0x68] sm:$0xff] %v471
    %616 = vst [vmem:[#allocation5 + $0x70] sm:$0xff] %v472
    %617 = vst [vmem:[#allocation5 + $0x78] sm:$0xff] %v473
    %618 = vst [vmem:[#allocation5 + $0x80] sm:$0xff] %v474
    %619 = vst [vmem:[#allocation5 + $0x88] sm:$0xff] %v475
    %620 = vst [vmem:[#allocation5 + $0x90] sm:$0xff] %v476
    %621 = vst [vmem:[#allocation5 + $0x98] sm:$0xff] %v477
    %622 = vst [vmem:[#allocation5 + $0xa0] sm:$0xff] %v478
    %623 = vst [vmem:[#allocation5 + $0xa8] sm:$0xff] %v479
    %624 = vst [vmem:[#allocation5 + $0xb0] sm:$0xff] %v480
    %625 = vst [vmem:[#allocation5 + $0xb8] sm:$0xff] %v481
    %626 = vst [vmem:[#allocation5 + $0xc0] sm:$0xff] %v482
    %627 = vst [vmem:[#allocation5 + $0xc8] sm:$0xff] %v483
    %628 = vst [vmem:[#allocation5 + $0xd0] sm:$0xff] %v484
    %629 = vst [vmem:[#allocation5 + $0xd8] sm:$0xff] %v485
    %630 = vst [vmem:[#allocation5 + $0xe0] sm:$0xff] %v486
    %631 = vst [vmem:[#allocation5 + $0xe8] sm:$0xff] %v487
    %632 = vst [vmem:[#allocation5 + $0xf0] sm:$0xff] %v488
    %633 = vst [vmem:[#allocation5 + $0xf8] sm:$0xff] %v489
    %634 = vst [vmem:[#allocation5 + $0x100] sm:$0xff] %v490
    %635 = vst [vmem:[#allocation5 + $0x108] sm:$0xff] %v491
    %636 = vst [vmem:[#allocation5 + $0x110] sm:$0xff] %v492
    %637 = vst [vmem:[#allocation5 + $0x118] sm:$0xff] %v493
    %638 = vst [vmem:[#allocation5 + $0x120] sm:$0xff] %v494
    %639 = vst [vmem:[#allocation5 + $0x128] sm:$0xff] %v495
    %640 = vst [vmem:[#allocation5 + $0x130] sm:$0xff] %v496
    %641 = vst [vmem:[#allocation5 + $0x138] sm:$0xff] %v497
    %642 = vst [vmem:[#allocation5 + $0x140] sm:$0xff] %v498
    %643 = vst [vmem:[#allocation5 + $0x148] sm:$0xff] %v499
    %644 = vst [vmem:[#allocation5 + $0x150] sm:$0xff] %v500
    %645 = vst [vmem:[#allocation5 + $0x158] sm:$0xff] %v501
    %646 = vst [vmem:[#allocation5 + $0x160] sm:$0xff] %v502
    %647 = vst [vmem:[#allocation5 + $0x168] sm:$0xff] %v503
    %648 = vst [vmem:[#allocation5 + $0x170] sm:$0xff] %v504
    %649 = vst [vmem:[#allocation5 + $0x178] sm:$0xff] %v505
    %650 = vst [vmem:[#allocation5 + $0x180] sm:$0xff] %v506
    %651 = vst [vmem:[#allocation5 + $0x188] sm:$0xff] %v507
    %652 = vst [vmem:[#allocation5 + $0x190] sm:$0xff] %v508
    %653 = vst [vmem:[#allocation5 + $0x198] sm:$0xff] %v509
    %654 = vst [vmem:[#allocation5 + $0x1a0] sm:$0xff] %v510
    %655 = vst [vmem:[#allocation5 + $0x1a8] sm:$0xff] %v511
    %656 = vst [vmem:[#allocation5 + $0x1b0] sm:$0xff] %v512
    %657 = vst [vmem:[#allocation5 + $0x1b8] sm:$0xff] %v513
    %658 = vst [vmem:[#allocation5 + $0x1c0] sm:$0xff] %v514
    %659 = vst [vmem:[#allocation5 + $0x1c8] sm:$0xff] %v515
    %660 = vst [vmem:[#allocation5 + $0x1d0] sm:$0xff] %v516
    %661 = vst [vmem:[#allocation5 + $0x1d8] sm:$0xff] %v517
    %662 = vst [vmem:[#allocation5 + $0x1e0] sm:$0xff] %v518
    %663 = vst [vmem:[#allocation5 + $0x1e8] sm:$0xff] %v519
    %664 = vst [vmem:[#allocation5 + $0x1f0] sm:$0xff] %v520
    %665 = vst [vmem:[#allocation5 + $0x1f8] sm:$0xff] %v521
    %666 = vst [vmem:[#allocation5 + $0x200] sm:$0xff] %v522
    %667 = vst [vmem:[#allocation5 + $0x208] sm:$0xff] %v523
    %668 = vst [vmem:[#allocation5 + $0x210] sm:$0xff] %v524
    %669 = vst [vmem:[#allocation5 + $0x218] sm:$0xff] %v525
    %670 = vst [vmem:[#allocation5 + $0x220] sm:$0xff] %v526
    %671 = vst [vmem:[#allocation5 + $0x228] sm:$0xff] %v527
    %672 = vst [vmem:[#allocation5 + $0x230] sm:$0xff] %v528
    %673 = vst [vmem:[#allocation5 + $0x238] sm:$0xff] %v529
    %674 = vst [vmem:[#allocation5 + $0x240] sm:$0xff] %v530
    %675 = vst [vmem:[#allocation5 + $0x248] sm:$0xff] %v531
    %676 = vst [vmem:[#allocation5 + $0x250] sm:$0xff] %v532
    %677 = vst [vmem:[#allocation5 + $0x258] sm:$0xff] %v533
    %678 = vst [vmem:[#allocation5 + $0x260] sm:$0xff] %v534
    %679 = vst [vmem:[#allocation5 + $0x268] sm:$0xff] %v535
    %680 = vst [vmem:[#allocation5 + $0x270] sm:$0xff] %v536
    %681 = vst [vmem:[#allocation5 + $0x278] sm:$0xff] %v537
    %682 = vst [vmem:[#allocation5 + $0x280] sm:$0xff] %v538
    %683 = vst [vmem:[#allocation5 + $0x288] sm:$0xff] %v539
    %684 = vst [vmem:[#allocation5 + $0x290] sm:$0xff] %v540
    %685 = vst [vmem:[#allocation5 + $0x298] sm:$0xff] %v541
    %686 = vst [vmem:[#allocation5 + $0x2a0] sm:$0xff] %v542
    %687 = vst [vmem:[#allocation5 + $0x2a8] sm:$0xff] %v543
    %688 = vst [vmem:[#allocation5 + $0x2b0] sm:$0xff] %v544
    %689 = vst [vmem:[#allocation5 + $0x2b8] sm:$0xff] %v545
    %690 = vst [vmem:[#allocation5 + $0x2c0] sm:$0xff] %v546
    %691 = vst [vmem:[#allocation5 + $0x2c8] sm:$0xff] %v547
    %692 = vst [vmem:[#allocation5 + $0x2d0] sm:$0xff] %v548
    %693 = vst [vmem:[#allocation5 + $0x2d8] sm:$0xff] %v549
    %694 = vst [vmem:[#allocation5 + $0x2e0] sm:$0xff] %v550
    %695 = vst [vmem:[#allocation5 + $0x2e8] sm:$0xff] %v551
    %696 = vst [vmem:[#allocation5 + $0x2f0] sm:$0xff] %v552
    %697 = vst [vmem:[#allocation5 + $0x2f8] sm:$0xff] %v553
    %698 = vst [vmem:[#allocation5 + $0x300] sm:$0xff] %v554
    %699 = vst [vmem:[#allocation5 + $0x308] sm:$0xff] %v555
    %700 = vst [vmem:[#allocation5 + $0x310] sm:$0xff] %v556
    %701 = vst [vmem:[#allocation5 + $0x318] sm:$0xff] %v557
    %702 = vst [vmem:[#allocation5 + $0x320] sm:$0xff] %v558
    %703 = vst [vmem:[#allocation5 + $0x328] sm:$0xff] %v559
    %704 = vst [vmem:[#allocation5 + $0x330] sm:$0xff] %v560
    %705 = vst [vmem:[#allocation5 + $0x338] sm:$0xff] %v561
    %706 = vst [vmem:[#allocation5 + $0x340] sm:$0xff] %v562
    %707 = vst [vmem:[#allocation5 + $0x348] sm:$0xff] %v563
    %708 = vst [vmem:[#allocation5 + $0x350] sm:$0xff] %v564
    %709 = vst [vmem:[#allocation5 + $0x358] sm:$0xff] %v565
    %710 = vst [vmem:[#allocation5 + $0x360] sm:$0xff] %v566
    %711 = vst [vmem:[#allocation5 + $0x368] sm:$0xff] %v567
    %712 = vst [vmem:[#allocation5 + $0x370] sm:$0xff] %v568
    %713 = vst [vmem:[#allocation5 + $0x378] sm:$0xff] %v569
    %714 = vst [vmem:[#allocation5 + $0x380] sm:$0xff] %v570
    %715 = vst [vmem:[#allocation5 + $0x388] sm:$0xff] %v571
    %716 = vst [vmem:[#allocation5 + $0x390] sm:$0xff] %v572
    %717 = vst [vmem:[#allocation5 + $0x398] sm:$0xff] %v573
    %718 = vst [vmem:[#allocation5 + $0x3a0] sm:$0xff] %v574
    %719 = vst [vmem:[#allocation5 + $0x3a8] sm:$0xff] %v575
    %720 = vst [vmem:[#allocation5 + $0x3b0] sm:$0xff] %v576
    %721 = vst [vmem:[#allocation5 + $0x3b8] sm:$0xff] %v577
    %722 = vst [vmem:[#allocation5 + $0x3c0] sm:$0xff] %v578
    %723 = vst [vmem:[#allocation5 + $0x3c8] sm:$0xff] %v579
    %724 = vst [vmem:[#allocation5 + $0x3d0] sm:$0xff] %v580
    %725 = vst [vmem:[#allocation5 + $0x3d8] sm:$0xff] %v581
    %726 = vst [vmem:[#allocation5 + $0x3e0] sm:$0xff] %v582
    %727 = vst [vmem:[#allocation5 + $0x3e8] sm:$0xff] %v583
    %728 = vst [vmem:[#allocation5 + $0x3f0] sm:$0xff] %v584
    %729 = vst [vmem:[#allocation5 + $0x3f8] sm:$0xff] %v585
    %730 = vst [vmem:[#allocation5 + $0x400] sm:$0xff] %v586
    %731 = vst [vmem:[#allocation5 + $0x408] sm:$0xff] %v587
    %732 = vst [vmem:[#allocation5 + $0x410] sm:$0xff] %v588
    %733 = vst [vmem:[#allocation5 + $0x418] sm:$0xff] %v589
    %734 = vst [vmem:[#allocation5 + $0x420] sm:$0xff] %v590
    %735 = vst [vmem:[#allocation5 + $0x428] sm:$0xff] %v591
    %736 = vst [vmem:[#allocation5 + $0x430] sm:$0xff] %v592
    %737 = vst [vmem:[#allocation5 + $0x438] sm:$0xff] %v593
    %738 = vst [vmem:[#allocation5 + $0x440] sm:$0xff] %v594
    %739 = vst [vmem:[#allocation5 + $0x448] sm:$0xff] %v595
    %740 = vst [vmem:[#allocation5 + $0x450] sm:$0xff] %v596
    %741 = vst [vmem:[#allocation5 + $0x458] sm:$0xff] %v597
    %742 = vst [vmem:[#allocation5 + $0x460] sm:$0xff] %v598
    %743 = vst [vmem:[#allocation5 + $0x468] sm:$0xff] %v599
    %744 = vst [vmem:[#allocation5 + $0x470] sm:$0xff] %v600
    %745 = vst [vmem:[#allocation5 + $0x478] sm:$0xff] %v601
    %v746 = vmax.f32 %v26, 0.0
    %v747 = vmax.f32 %v27, 0.0
    %v748 = vmax.f32 %v28, 0.0
    %v749 = vmax.f32 %v29, 0.0
    %v750 = vmax.f32 %v30, 0.0
    %v751 = vmax.f32 %v31, 0.0
    %v752 = vmax.f32 %v32, 0.0
    %v753 = vmax.f32 %v33, 0.0
    %v754 = vmax.f32 %v34, 0.0
    %v755 = vmax.f32 %v35, 0.0
    %v756 = vmax.f32 %v36, 0.0
    %v757 = vmax.f32 %v37, 0.0
    %v758 = vmax.f32 %v38, 0.0
    %v759 = vmax.f32 %v39, 0.0
    %v760 = vmax.f32 %v40, 0.0
    %v761 = vmax.f32 %v41, 0.0
    %v762 = vmax.f32 %v42, 0.0
    %v763 = vmax.f32 %v43, 0.0
    %v764 = vmax.f32 %v44, 0.0
    %v765 = vmax.f32 %v45, 0.0
    %v766 = vmax.f32 %v46, 0.0
    %v767 = vmax.f32 %v47, 0.0
    %v768 = vmax.f32 %v48, 0.0
    %v769 = vmax.f32 %v49, 0.0
    %v770 = vmax.f32 %v50, 0.0
    %v771 = vmax.f32 %v51, 0.0
    %v772 = vmax.f32 %v52, 0.0
    %v773 = vmax.f32 %v53, 0.0
    %v774 = vmax.f32 %v54, 0.0
    %v775 = vmax.f32 %v55, 0.0
    %v776 = vmax.f32 %v56, 0.0
    %v777 = vmax.f32 %v57, 0.0
    %v778 = vmax.f32 %v58, 0.0
    %v779 = vmax.f32 %v59, 0.0
    %v780 = vmax.f32 %v60, 0.0
    %v781 = vmax.f32 %v61, 0.0
    %v782 = vmax.f32 %v62, 0.0
    %v783 = vmax.f32 %v63, 0.0
    %v784 = vmax.f32 %v64, 0.0
    %v785 = vmax.f32 %v65, 0.0
    %v786 = vmax.f32 %v66, 0.0
    %v787 = vmax.f32 %v67, 0.0
    %v788 = vmax.f32 %v68, 0.0
    %v789 = vmax.f32 %v69, 0.0
    %v790 = vmax.f32 %v70, 0.0
    %v791 = vmax.f32 %v71, 0.0
    %v792 = vmax.f32 %v72, 0.0
    %v793 = vmax.f32 %v73, 0.0
    %v794 = vmax.f32 %v74, 0.0
    %v795 = vmax.f32 %v75, 0.0
    %v796 = vmax.f32 %v76, 0.0
    %v797 = vmax.f32 %v77, 0.0
    %v798 = vmax.f32 %v78, 0.0
    %v799 = vmax.f32 %v79, 0.0
    %v800 = vmax.f32 %v80, 0.0
    %v801 = vmax.f32 %v81, 0.0
    %v802 = vmax.f32 %v82, 0.0
    %v803 = vmax.f32 %v83, 0.0
    %v804 = vmax.f32 %v84, 0.0
    %v805 = vmax.f32 %v85, 0.0
    %v806 = vmax.f32 %v86, 0.0
    %v807 = vmax.f32 %v87, 0.0
    %v808 = vmax.f32 %v88, 0.0
    %v809 = vmax.f32 %v89, 0.0
    %v810 = vmax.f32 %v90, 0.0
    %v811 = vmax.f32 %v91, 0.0
    %v812 = vmax.f32 %v92, 0.0
    %v813 = vmax.f32 %v93, 0.0
    %v814 = vmax.f32 %v94, 0.0
    %v815 = vmax.f32 %v95, 0.0
    %v816 = vmax.f32 %v96, 0.0
    %v817 = vmax.f32 %v97, 0.0
    %v818 = vmax.f32 %v98, 0.0
    %v819 = vmax.f32 %v99, 0.0
    %v820 = vmax.f32 %v100, 0.0
    %v821 = vmax.f32 %v101, 0.0
    %v822 = vmax.f32 %v102, 0.0
    %v823 = vmax.f32 %v103, 0.0
    %v824 = vmax.f32 %v104, 0.0
    %v825 = vmax.f32 %v105, 0.0
    %v826 = vmax.f32 %v106, 0.0
    %v827 = vmax.f32 %v107, 0.0
    %v828 = vmax.f32 %v108, 0.0
    %v829 = vmax.f32 %v109, 0.0
    %v830 = vmax.f32 %v110, 0.0
    %v831 = vmax.f32 %v111, 0.0
    %v832 = vmax.f32 %v112, 0.0
    %v833 = vmax.f32 %v113, 0.0
    %v834 = vmax.f32 %v114, 0.0
    %v835 = vmax.f32 %v115, 0.0
    %v836 = vmax.f32 %v116, 0.0
    %v837 = vmax.f32 %v117, 0.0
    %v838 = vmax.f32 %v118, 0.0
    %v839 = vmax.f32 %v119, 0.0
    %v840 = vmax.f32 %v120, 0.0
    %v841 = vmax.f32 %v121, 0.0
    %v842 = vmax.f32 %v122, 0.0
    %v843 = vmax.f32 %v123, 0.0
    %v844 = vmax.f32 %v124, 0.0
    %v845 = vmax.f32 %v125, 0.0
    %v846 = vmax.f32 %v126, 0.0
    %v847 = vmax.f32 %v127, 0.0
    %v848 = vmax.f32 %v128, 0.0
    %v849 = vmax.f32 %v129, 0.0
    %v850 = vmax.f32 %v130, 0.0
    %v851 = vmax.f32 %v131, 0.0
    %v852 = vmax.f32 %v132, 0.0
    %v853 = vmax.f32 %v133, 0.0
    %v854 = vmax.f32 %v134, 0.0
    %v855 = vmax.f32 %v135, 0.0
    %v856 = vmax.f32 %v136, 0.0
    %v857 = vmax.f32 %v137, 0.0
    %v858 = vmax.f32 %v138, 0.0
    %v859 = vmax.f32 %v139, 0.0
    %v860 = vmax.f32 %v140, 0.0
    %v861 = vmax.f32 %v141, 0.0
    %v862 = vmax.f32 %v142, 0.0
    %v863 = vmax.f32 %v143, 0.0
    %v864 = vmax.f32 %v144, 0.0
    %v865 = vmax.f32 %v145, 0.0
    %v866 = vmax.f32 %v146, 0.0
    %v867 = vmax.f32 %v147, 0.0
    %v868 = vmax.f32 %v148, 0.0
    %v869 = vmax.f32 %v149, 0.0
    %v870 = vmax.f32 %v150, 0.0
    %v871 = vmax.f32 %v151, 0.0
    %v872 = vmax.f32 %v152, 0.0
    %v873 = vmax.f32 %v153, 0.0
    %v874 = vmax.f32 %v154, 0.0
    %v875 = vmax.f32 %v155, 0.0
    %v876 = vmax.f32 %v156, 0.0
    %v877 = vmax.f32 %v157, 0.0
    %v878 = vmax.f32 %v158, 0.0
    %v879 = vmax.f32 %v159, 0.0
    %v880 = vmax.f32 %v160, 0.0
    %v881 = vmax.f32 %v161, 0.0
    %v882 = vmax.f32 %v162, 0.0
    %v883 = vmax.f32 %v163, 0.0
    %v884 = vmax.f32 %v164, 0.0
    %v885 = vmax.f32 %v165, 0.0
    %v886 = vmax.f32 %v166, 0.0
    %v887 = vmax.f32 %v167, 0.0
    %v888 = vmax.f32 %v168, 0.0
    %v889 = vmax.f32 %v169, 0.0
    %890 = vst [vmem:[#allocation6] sm:$0xff] %v746
    %891 = vst [vmem:[#allocation6 + $0x8] sm:$0xff] %v747
    %892 = vst [vmem:[#allocation6 + $0x10] sm:$0xff] %v748
    %893 = vst [vmem:[#allocation6 + $0x18] sm:$0xff] %v749
    %894 = vst [vmem:[#allocation6 + $0x20] sm:$0xff] %v750
    %895 = vst [vmem:[#allocation6 + $0x28] sm:$0xff] %v751
    %896 = vst [vmem:[#allocation6 + $0x30] sm:$0xff] %v752
    %897 = vst [vmem:[#allocation6 + $0x38] sm:$0xff] %v753
    %898 = vst [vmem:[#allocation6 + $0x40] sm:$0xff] %v754
    %899 = vst [vmem:[#allocation6 + $0x48] sm:$0xff] %v755
    %900 = vst [vmem:[#allocation6 + $0x50] sm:$0xff] %v756
    %901 = vst [vmem:[#allocation6 + $0x58] sm:$0xff] %v757
    %902 = vst [vmem:[#allocation6 + $0x60] sm:$0xff] %v758
    %903 = vst [vmem:[#allocation6 + $0x68] sm:$0xff] %v759
    %904 = vst [vmem:[#allocation6 + $0x70] sm:$0xff] %v760
    %905 = vst [vmem:[#allocation6 + $0x78] sm:$0xff] %v761
    %906 = vst [vmem:[#allocation6 + $0x80] sm:$0xff] %v762
    %907 = vst [vmem:[#allocation6 + $0x88] sm:$0xff] %v763
    %908 = vst [vmem:[#allocation6 + $0x90] sm:$0xff] %v764
    %909 = vst [vmem:[#allocation6 + $0x98] sm:$0xff] %v765
    %910 = vst [vmem:[#allocation6 + $0xa0] sm:$0xff] %v766
    %911 = vst [vmem:[#allocation6 + $0xa8] sm:$0xff] %v767
    %912 = vst [vmem:[#allocation6 + $0xb0] sm:$0xff] %v768
    %913 = vst [vmem:[#allocation6 + $0xb8] sm:$0xff] %v769
    %914 = vst [vmem:[#allocation6 + $0xc0] sm:$0xff] %v770
    %915 = vst [vmem:[#allocation6 + $0xc8] sm:$0xff] %v771
    %916 = vst [vmem:[#allocation6 + $0xd0] sm:$0xff] %v772
    %917 = vst [vmem:[#allocation6 + $0xd8] sm:$0xff] %v773
    %918 = vst [vmem:[#allocation6 + $0xe0] sm:$0xff] %v774
    %919 = vst [vmem:[#allocation6 + $0xe8] sm:$0xff] %v775
    %920 = vst [vmem:[#allocation6 + $0xf0] sm:$0xff] %v776
    %921 = vst [vmem:[#allocation6 + $0xf8] sm:$0xff] %v777
    %922 = vst [vmem:[#allocation6 + $0x100] sm:$0xff] %v778
    %923 = vst [vmem:[#allocation6 + $0x108] sm:$0xff] %v779
    %924 = vst [vmem:[#allocation6 + $0x110] sm:$0xff] %v780
    %925 = vst [vmem:[#allocation6 + $0x118] sm:$0xff] %v781
    %926 = vst [vmem:[#allocation6 + $0x120] sm:$0xff] %v782
    %927 = vst [vmem:[#allocation6 + $0x128] sm:$0xff] %v783
    %928 = vst [vmem:[#allocation6 + $0x130] sm:$0xff] %v784
    %929 = vst [vmem:[#allocation6 + $0x138] sm:$0xff] %v785
    %930 = vst [vmem:[#allocation6 + $0x140] sm:$0xff] %v786
    %931 = vst [vmem:[#allocation6 + $0x148] sm:$0xff] %v787
    %932 = vst [vmem:[#allocation6 + $0x150] sm:$0xff] %v788
    %933 = vst [vmem:[#allocation6 + $0x158] sm:$0xff] %v789
    %934 = vst [vmem:[#allocation6 + $0x160] sm:$0xff] %v790
    %935 = vst [vmem:[#allocation6 + $0x168] sm:$0xff] %v791
    %936 = vst [vmem:[#allocation6 + $0x170] sm:$0xff] %v792
    %937 = vst [vmem:[#allocation6 + $0x178] sm:$0xff] %v793
    %938 = vst [vmem:[#allocation6 + $0x180] sm:$0xff] %v794
    %939 = vst [vmem:[#allocation6 + $0x188] sm:$0xff] %v795
    %940 = vst [vmem:[#allocation6 + $0x190] sm:$0xff] %v796
    %941 = vst [vmem:[#allocation6 + $0x198] sm:$0xff] %v797
    %942 = vst [vmem:[#allocation6 + $0x1a0] sm:$0xff] %v798
    %943 = vst [vmem:[#allocation6 + $0x1a8] sm:$0xff] %v799
    %944 = vst [vmem:[#allocation6 + $0x1b0] sm:$0xff] %v800
    %945 = vst [vmem:[#allocation6 + $0x1b8] sm:$0xff] %v801
    %946 = vst [vmem:[#allocation6 + $0x1c0] sm:$0xff] %v802
    %947 = vst [vmem:[#allocation6 + $0x1c8] sm:$0xff] %v803
    %948 = vst [vmem:[#allocation6 + $0x1d0] sm:$0xff] %v804
    %949 = vst [vmem:[#allocation6 + $0x1d8] sm:$0xff] %v805
    %950 = vst [vmem:[#allocation6 + $0x1e0] sm:$0xff] %v806
    %951 = vst [vmem:[#allocation6 + $0x1e8] sm:$0xff] %v807
    %952 = vst [vmem:[#allocation6 + $0x1f0] sm:$0xff] %v808
    %953 = vst [vmem:[#allocation6 + $0x1f8] sm:$0xff] %v809
    %954 = vst [vmem:[#allocation6 + $0x200] sm:$0xff] %v810
    %955 = vst [vmem:[#allocation6 + $0x208] sm:$0xff] %v811
    %956 = vst [vmem:[#allocation6 + $0x210] sm:$0xff] %v812
    %957 = vst [vmem:[#allocation6 + $0x218] sm:$0xff] %v813
    %958 = vst [vmem:[#allocation6 + $0x220] sm:$0xff] %v814
    %959 = vst [vmem:[#allocation6 + $0x228] sm:$0xff] %v815
    %960 = vst [vmem:[#allocation6 + $0x230] sm:$0xff] %v816
    %961 = vst [vmem:[#allocation6 + $0x238] sm:$0xff] %v817
    %962 = vst [vmem:[#allocation6 + $0x240] sm:$0xff] %v818
    %963 = vst [vmem:[#allocation6 + $0x248] sm:$0xff] %v819
    %964 = vst [vmem:[#allocation6 + $0x250] sm:$0xff] %v820
    %965 = vst [vmem:[#allocation6 + $0x258] sm:$0xff] %v821
    %966 = vst [vmem:[#allocation6 + $0x260] sm:$0xff] %v822
    %967 = vst [vmem:[#allocation6 + $0x268] sm:$0xff] %v823
    %968 = vst [vmem:[#allocation6 + $0x270] sm:$0xff] %v824
    %969 = vst [vmem:[#allocation6 + $0x278] sm:$0xff] %v825
    %970 = vst [vmem:[#allocation6 + $0x280] sm:$0xff] %v826
    %971 = vst [vmem:[#allocation6 + $0x288] sm:$0xff] %v827
    %972 = vst [vmem:[#allocation6 + $0x290] sm:$0xff] %v828
    %973 = vst [vmem:[#allocation6 + $0x298] sm:$0xff] %v829
    %974 = vst [vmem:[#allocation6 + $0x2a0] sm:$0xff] %v830
    %975 = vst [vmem:[#allocation6 + $0x2a8] sm:$0xff] %v831
    %976 = vst [vmem:[#allocation6 + $0x2b0] sm:$0xff] %v832
    %977 = vst [vmem:[#allocation6 + $0x2b8] sm:$0xff] %v833
    %978 = vst [vmem:[#allocation6 + $0x2c0] sm:$0xff] %v834
    %979 = vst [vmem:[#allocation6 + $0x2c8] sm:$0xff] %v835
    %980 = vst [vmem:[#allocation6 + $0x2d0] sm:$0xff] %v836
    %981 = vst [vmem:[#allocation6 + $0x2d8] sm:$0xff] %v837
    %982 = vst [vmem:[#allocation6 + $0x2e0] sm:$0xff] %v838
    %983 = vst [vmem:[#allocation6 + $0x2e8] sm:$0xff] %v839
    %984 = vst [vmem:[#allocation6 + $0x2f0] sm:$0xff] %v840
    %985 = vst [vmem:[#allocation6 + $0x2f8] sm:$0xff] %v841
    %986 = vst [vmem:[#allocation6 + $0x300] sm:$0xff] %v842
    %987 = vst [vmem:[#allocation6 + $0x308] sm:$0xff] %v843
    %988 = vst [vmem:[#allocation6 + $0x310] sm:$0xff] %v844
    %989 = vst [vmem:[#allocation6 + $0x318] sm:$0xff] %v845
    %990 = vst [vmem:[#allocation6 + $0x320] sm:$0xff] %v846
    %991 = vst [vmem:[#allocation6 + $0x328] sm:$0xff] %v847
    %992 = vst [vmem:[#allocation6 + $0x330] sm:$0xff] %v848
    %993 = vst [vmem:[#allocation6 + $0x338] sm:$0xff] %v849
    %994 = vst [vmem:[#allocation6 + $0x340] sm:$0xff] %v850
    %995 = vst [vmem:[#allocation6 + $0x348] sm:$0xff] %v851
    %996 = vst [vmem:[#allocation6 + $0x350] sm:$0xff] %v852
    %997 = vst [vmem:[#allocation6 + $0x358] sm:$0xff] %v853
    %998 = vst [vmem:[#allocation6 + $0x360] sm:$0xff] %v854
    %999 = vst [vmem:[#allocation6 + $0x368] sm:$0xff] %v855
    %1000 = vst [vmem:[#allocation6 + $0x370] sm:$0xff] %v856
    %1001 = vst [vmem:[#allocation6 + $0x378] sm:$0xff] %v857
    %1002 = vst [vmem:[#allocation6 + $0x380] sm:$0xff] %v858
    %1003 = vst [vmem:[#allocation6 + $0x388] sm:$0xff] %v859
    %1004 = vst [vmem:[#allocation6 + $0x390] sm:$0xff] %v860
    %1005 = vst [vmem:[#allocation6 + $0x398] sm:$0xff] %v861
    %1006 = vst [vmem:[#allocation6 + $0x3a0] sm:$0xff] %v862
    %1007 = vst [vmem:[#allocation6 + $0x3a8] sm:$0xff] %v863
    %1008 = vst [vmem:[#allocation6 + $0x3b0] sm:$0xff] %v864
    %1009 = vst [vmem:[#allocation6 + $0x3b8] sm:$0xff] %v865
    %1010 = vst [vmem:[#allocation6 + $0x3c0] sm:$0xff] %v866
    %1011 = vst [vmem:[#allocation6 + $0x3c8] sm:$0xff] %v867
    %1012 = vst [vmem:[#allocation6 + $0x3d0] sm:$0xff] %v868
    %1013 = vst [vmem:[#allocation6 + $0x3d8] sm:$0xff] %v869
    %1014 = vst [vmem:[#allocation6 + $0x3e0] sm:$0xff] %v870
    %1015 = vst [vmem:[#allocation6 + $0x3e8] sm:$0xff] %v871
    %1016 = vst [vmem:[#allocation6 + $0x3f0] sm:$0xff] %v872
    %1017 = vst [vmem:[#allocation6 + $0x3f8] sm:$0xff] %v873
    %1018 = vst [vmem:[#allocation6 + $0x400] sm:$0xff] %v874
    %1019 = vst [vmem:[#allocation6 + $0x408] sm:$0xff] %v875
    %1020 = vst [vmem:[#allocation6 + $0x410] sm:$0xff] %v876
    %1021 = vst [vmem:[#allocation6 + $0x418] sm:$0xff] %v877
    %1022 = vst [vmem:[#allocation6 + $0x420] sm:$0xff] %v878
    %1023 = vst [vmem:[#allocation6 + $0x428] sm:$0xff] %v879
    %1024 = vst [vmem:[#allocation6 + $0x430] sm:$0xff] %v880
    %1025 = vst [vmem:[#allocation6 + $0x438] sm:$0xff] %v881
    %1026 = vst [vmem:[#allocation6 + $0x440] sm:$0xff] %v882
    %1027 = vst [vmem:[#allocation6 + $0x448] sm:$0xff] %v883
    %1028 = vst [vmem:[#allocation6 + $0x450] sm:$0xff] %v884
    %1029 = vst [vmem:[#allocation6 + $0x458] sm:$0xff] %v885
    %1030 = vst [vmem:[#allocation6 + $0x460] sm:$0xff] %v886
    %1031 = vst [vmem:[#allocation6 + $0x468] sm:$0xff] %v887
    %1032 = vst [vmem:[#allocation6 + $0x470] sm:$0xff] %v888
    %1033 = vst [vmem:[#allocation6 + $0x478] sm:$0xff] %v889
    // Predicated region
    $region10: #{tpu_custom_call.1} parent=1 // pred_check
      _
    $region11: #{tpu_custom_call.1} parent=1 // pred_check_branch
      %1035 = sbr.rel (0) target = $region13
    $region12: #{tpu_custom_call.1} parent=1 // pred_region
      %s1037 = ssub.s32 18432, 18432
      %1038 = vsyncadd [#allocation4], %s1037
      %s1039 = sshll.u32 [#allocation5], 4
      %s1040 = int_to_ptr.vmem [resolvable:$true] %s1039
      %1045 = dma.vmem_to_hbm [thread:$0]  %s1040, 18432, %s1, [#allocation4], 128, 128, 8
    $region13: #{tpu_custom_call.1} parent=1 // pred_fallthru
      _
    // Predicated region
    $region14: #{tpu_custom_call.1} parent=1 // pred_check
      _
    $region15: #{tpu_custom_call.1} parent=1 // pred_check_branch
      %1047 = sbr.rel (0) target = $region17
    $region16: #{tpu_custom_call.1} parent=1 // pred_region
      %s1049 = ssub.s32 18432, 18432
      %1050 = vsyncadd [#allocation7], %s1049
      %s1051 = sshll.u32 [#allocation6], 4
      %s1052 = int_to_ptr.vmem [resolvable:$true] %s1051
      %1057 = dma.vmem_to_hbm [thread:$0]  %s1052, 18432, %s2, [#allocation7], 128, 128, 8
    $region17: #{tpu_custom_call.1} parent=1 // pred_fallthru
      _
    // Predicated region
    $region18: #{tpu_custom_call.1} parent=1 // pred_check
      _
    $region19: #{tpu_custom_call.1} parent=1 // pred_check_branch
      %1059 = sbr.rel (0) target = $region21
    $region20: #{tpu_custom_call.1} parent=1 // pred_region
      %1060 = dma.done [#allocation4], 18432
    $region21: #{tpu_custom_call.1} parent=1 // pred_fallthru
      _
    // Predicated region
    $region22: #{tpu_custom_call.1} parent=1 // pred_check
      _
    $region23: #{tpu_custom_call.1} parent=1 // pred_check_branch
      %1062 = sbr.rel (0) target = $region25
    $region24: #{tpu_custom_call.1} parent=1 // pred_region
      %1063 = dma.done [#allocation7], 18432
    $region25: #{tpu_custom_call.1} parent=1 // pred_fallthru
      _
    %1064 = vsyncpa [#allocation3], 1
    %1065 = vsyncpa [#allocation4], 1
    %1066 = vsyncpa [#allocation7], 1

</llo_original>
